<compile_context>
chip_gen: v5e
topology: v5e:2x2
jax: 0.10.0
libtpu: 0.0.40
codegen_flags: <defaults>
</compile_context>

<pallas_src>
import jax
import jax.numpy as jnp
from jax.experimental import pallas as pl
from jax.experimental.pallas import tpu as pltpu

# Model configuration (mirrors PINN(input_dim=6, output_dim=4, hidden_dim=32,
# num_layers=3, system=...); `system` only matters for the physics loss).
INPUT_DIM = 6          # dt(1) + state(4) + force(1)
INPUT_PAD = 8          # pad 6 -> 8 features (sublane granule)
OUTPUT_DIM = 4
OUTPUT_PAD = 8         # pad 4 -> 8 output rows (unmasked sublane store)
HIDDEN_DIM = 32
NUM_LAYERS = 3
LANE = 128
TILE_B_MAX = 2048      # max batch tile (lane dim), multiple of 128


def _round_up(x, m):
    return (x + m - 1) // m * m


def _choose_tile(b):
    """Pick (tile_b, num_tiles) so that tile_b is a multiple of 128,
    tile_b <= TILE_B_MAX, and total padding is minimised."""
    n_chunks = -(-b // LANE)                    # ceil(b / 128)
    max_chunks = TILE_B_MAX // LANE
    n_tiles = -(-n_chunks // max_chunks)        # ceil
    chunks_per_tile = -(-n_chunks // n_tiles)   # ceil
    return chunks_per_tile * LANE, n_tiles


def pinn_kernel(x_ref, w_ref, b_ref, out_ref):
    """One batch tile of the PINN MLP, feature-major (lanes = batch).

    x_ref:   (INPUT_PAD, TILE_B)   rows 0..5 = [dt, x1, v1, x2, v2, force]
    w_ref:   (4, H, H)  transposed weights (out, in), zero-padded
    b_ref:   (4, H, 1)  biases as column vectors, zero-padded
    out_ref: (OUTPUT_PAD, TILE_B)  rows 0..3 = prediction, rows 4..7 = 0
    """
    x = x_ref[...]                                                 # (8, TB)

    # layer 0: Linear(6->H) + tanh   (W0^T occupies cols 0..5 of slot 0)
    h = jnp.tanh(
        jnp.dot(w_ref[0, :, 0:INPUT_PAD], x,
                preferred_element_type=jnp.float32) + b_ref[0])    # (32, TB)
    # layer 1: Linear(H->H) + tanh
    h = jnp.tanh(
        jnp.dot(w_ref[1], h, preferred_element_type=jnp.float32) + b_ref[1])
    # layer 2: Linear(H->H) + tanh
    h = jnp.tanh(
        jnp.dot(w_ref[2], h, preferred_element_type=jnp.float32) + b_ref[2])
    # output layer: Linear(H->4), no activation (Wo^T occupies rows 0..3;
    # rows 4..7 are zero so the padded store rows stay 0).
    out = (jnp.dot(w_ref[3, 0:OUTPUT_PAD, :], h,
                   preferred_element_type=jnp.float32)
           + b_ref[3, 0:OUTPUT_PAD])                               # (8, TB)
    out_ref[...] = out.astype(out_ref.dtype)


def _pack_params(params):
    """Pack [w0,b0,w1,b1,w2,b2,wo,bo] (weights stored (in,out)) into one
    transposed, zero-padded (4,H,H) weight stack and one (4,H,1) bias stack."""
    w0, b0, w1, b1, w2, b2, wo, bo = params
    W = jnp.zeros((4, HIDDEN_DIM, HIDDEN_DIM), jnp.float32)
    W = W.at[0, :, :INPUT_DIM].set(w0.T)         # (32, 6)
    W = W.at[1].set(w1.T)                        # (32, 32)
    W = W.at[2].set(w2.T)                        # (32, 32)
    W = W.at[3, :OUTPUT_DIM, :].set(wo.T)        # (4, 32)
    Bv = jnp.zeros((4, HIDDEN_DIM, 1), jnp.float32)
    Bv = Bv.at[0, :, 0].set(b0.reshape(-1))
    Bv = Bv.at[1, :, 0].set(b1.reshape(-1))
    Bv = Bv.at[2, :, 0].set(b2.reshape(-1))
    Bv = Bv.at[3, :OUTPUT_DIM, 0].set(bo.reshape(-1))
    return W, Bv


@jax.jit
def pinn_forward(dt, state, force, params):
    """Pallas forward pass.  dt:(B,1), state:(B,4), force:(B,1) -> (B,4)."""
    B = dt.shape[0]
    tile_b, n_tiles = _choose_tile(B)
    b_pad = tile_b * n_tiles

    # concat + transpose + pad in the wrapper (fused by XLA) -> one operand
    x = jnp.concatenate([dt, state, force], axis=1).astype(jnp.float32)  # (B,6)
    x_t = jnp.zeros((INPUT_PAD, b_pad), jnp.float32).at[:INPUT_DIM, :B].set(x.T)

    W, Bv = _pack_params(params)

    out_t = pl.pallas_call(
        pinn_kernel,
        out_shape=jax.ShapeDtypeStruct((OUTPUT_PAD, b_pad), jnp.float32),
        grid=(n_tiles,),
        in_specs=[
            pl.BlockSpec((INPUT_PAD, tile_b), lambda i: (0, i)),
            # weights/biases: constant index_map -> resident across the grid
            pl.BlockSpec((4, HIDDEN_DIM, HIDDEN_DIM), lambda i: (0, 0, 0)),
            pl.BlockSpec((4, HIDDEN_DIM, 1), lambda i: (0, 0, 0)),
        ],
        out_specs=pl.BlockSpec((OUTPUT_PAD, tile_b), lambda i: (0, i)),
        compiler_params=pltpu.CompilerParams(
            dimension_semantics=("parallel",)),   # shards batch across v7x TCs
    )(x_t, W, Bv)

    return out_t[:OUTPUT_DIM, :B].T               # (B, 4)


def init_params(key):
    """PyTorch nn.Linear default init: U(-1/sqrt(fan_in), 1/sqrt(fan_in)).
    Weights stored as (in_features, out_features), biases as (out_features,)."""
    dims = [(INPUT_DIM, HIDDEN_DIM),
            (HIDDEN_DIM, HIDDEN_DIM),
            (HIDDEN_DIM, HIDDEN_DIM),
            (HIDDEN_DIM, OUTPUT_DIM)]
    params = []
    for fan_in, fan_out in dims:
        key, kw, kb = jax.random.split(key, 3)
        bound = 1.0 / jnp.sqrt(fan_in)
        w = jax.random.uniform(kw, (fan_in, fan_out), jnp.float32, -bound, bound)
        b = jax.random.uniform(kb, (fan_out,), jnp.float32, -bound, bound)
        params += [w, b]
    return params


def pinn_forward_ref(dt, state, force, params):
    """Pure-JAX reference (same math as the PyTorch module's forward)."""
    x = jnp.concatenate([dt, state, force], axis=1)
    w0, b0, w1, b1, w2, b2, wo, bo = params
    x = jnp.tanh(x @ w0 + b0)
    x = jnp.tanh(x @ w1 + b1)
    x = jnp.tanh(x @ w2 + b2)
    return x @ wo + bo


if __name__ == "__main__":
    key = jax.random.PRNGKey(0)
    kp, kd, ks, kf = jax.random.split(key, 4)
    params = init_params(kp)

    # small demo batch (shapes the module's forward implies)
    B = 8
    dt = jax.random.uniform(kd, (B, 1), jnp.float32, 0.01, 0.1)
    state = jax.random.normal(ks, (B, 4), jnp.float32)
    force = jax.random.normal(kf, (B, 1), jnp.float32)

    out = jax.block_until_ready(pinn_forward(dt, state, force, params))
    ref = pinn_forward_ref(dt, state, force, params)
    assert out.shape == (B, OUTPUT_DIM)
    assert jnp.allclose(out, ref, atol=1e-4, rtol=1e-4), "mismatch vs reference (B=8)"

    # larger batch: exercises the multi-tile, pipelined, megacore-parallel grid
    B2 = 4352
    kd2, ks2, kf2 = jax.random.split(jax.random.PRNGKey(1), 3)
    dt2 = jax.random.uniform(kd2, (B2, 1), jnp.float32, 0.01, 0.1)
    state2 = jax.random.normal(ks2, (B2, 4), jnp.float32)
    force2 = jax.random.normal(kf2, (B2, 1), jnp.float32)
    out2 = jax.block_until_ready(pinn_forward(dt2, state2, force2, params))
    ref2 = pinn_forward_ref(dt2, state2, force2, params)
    assert out2.shape == (B2, OUTPUT_DIM)
    assert jnp.allclose(out2, ref2, atol=1e-4, rtol=1e-4), "mismatch vs reference (B=4352)"

    print("KERNEL_OK")
</pallas_src>

<mosaic_0001>
module attributes {stable_mosaic.version = 11 : i64} {
  func.func @pinn_kernel(%arg0: i32, %arg1: memref<8x128xf32, #tpu.memory_space<vmem>>, %arg2: memref<4x32x32xf32, #tpu.memory_space<vmem>>, %arg3: memref<4x32x1xf32, #tpu.memory_space<vmem>>, %arg4: memref<8x128xf32, #tpu.memory_space<vmem>>) attributes {dimension_semantics = [#tpu.dimension_semantics<parallel>], iteration_bounds = array<i64: 1>, scalar_prefetch = 0 : i64, scratch_operands = 0 : i64, tpu.core_type = #tpu.core_type<tc>, window_params = [{transform_indices = @transform_0, window_bounds = array<i64: 8, 128>}, {pipeline_mode = #tpu.pipeline_mode<synchronous>, transform_indices = @transform_1, window_bounds = array<i64: 4, 32, 32>}, {pipeline_mode = #tpu.pipeline_mode<synchronous>, transform_indices = @transform_2, window_bounds = array<i64: 4, 32, 1>}, {transform_indices = @transform_3, window_bounds = array<i64: 8, 128>}]} {
    %c0 = arith.constant 0 : index
    %c0_0 = arith.constant 0 : index
    %0 = vector.load %arg1[%c0, %c0_0] : memref<8x128xf32, #tpu.memory_space<vmem>>, vector<8x128xf32>
    %c0_1 = arith.constant 0 : index
    %c0_2 = arith.constant 0 : index
    %c0_3 = arith.constant 0 : index
    %1 = vector.load %arg2[%c0_1, %c0_2, %c0_3] : memref<4x32x32xf32, #tpu.memory_space<vmem>>, vector<1x32x8xf32>
    %2 = vector.shape_cast %1 : vector<1x32x8xf32> to vector<32x8xf32>
    %cst = arith.constant dense<0.000000e+00> : vector<32x128xf32>
    %3 = tpu.matmul %2, %0, %cst {dimension_numbers = #tpu.dot_dimension_numbers<[1], [0], [0], [1], [0, 0, 1, 1], [], []>} : vector<32x8xf32>, vector<8x128xf32>, vector<32x128xf32> -> vector<32x128xf32>
    %c0_4 = arith.constant 0 : index
    %c0_5 = arith.constant 0 : index
    %c0_6 = arith.constant 0 : index
    %4 = vector.load %arg3[%c0_4, %c0_5, %c0_6] : memref<4x32x1xf32, #tpu.memory_space<vmem>>, vector<1x32x1xf32>
    %5 = vector.shape_cast %4 : vector<1x32x1xf32> to vector<32x1xf32>
    %6 = vector.broadcast %5 : vector<32x1xf32> to vector<32x128xf32>
    %7 = arith.addf %3, %6 : vector<32x128xf32>
    %8 = math.tanh %7 : vector<32x128xf32>
    %c1 = arith.constant 1 : index
    %c0_7 = arith.constant 0 : index
    %c0_8 = arith.constant 0 : index
    %9 = vector.load %arg2[%c1, %c0_7, %c0_8] : memref<4x32x32xf32, #tpu.memory_space<vmem>>, vector<1x32x32xf32>
    %10 = vector.shape_cast %9 : vector<1x32x32xf32> to vector<32x32xf32>
    %cst_9 = arith.constant dense<0.000000e+00> : vector<32x128xf32>
    %11 = tpu.matmul %10, %8, %cst_9 {dimension_numbers = #tpu.dot_dimension_numbers<[1], [0], [0], [1], [0, 0, 1, 1], [], []>} : vector<32x32xf32>, vector<32x128xf32>, vector<32x128xf32> -> vector<32x128xf32>
    %c1_10 = arith.constant 1 : index
    %c0_11 = arith.constant 0 : index
    %c0_12 = arith.constant 0 : index
    %12 = vector.load %arg3[%c1_10, %c0_11, %c0_12] : memref<4x32x1xf32, #tpu.memory_space<vmem>>, vector<1x32x1xf32>
    %13 = vector.shape_cast %12 : vector<1x32x1xf32> to vector<32x1xf32>
    %14 = vector.broadcast %13 : vector<32x1xf32> to vector<32x128xf32>
    %15 = arith.addf %11, %14 : vector<32x128xf32>
    %16 = math.tanh %15 : vector<32x128xf32>
    %c2 = arith.constant 2 : index
    %c0_13 = arith.constant 0 : index
    %c0_14 = arith.constant 0 : index
    %17 = vector.load %arg2[%c2, %c0_13, %c0_14] : memref<4x32x32xf32, #tpu.memory_space<vmem>>, vector<1x32x32xf32>
    %18 = vector.shape_cast %17 : vector<1x32x32xf32> to vector<32x32xf32>
    %cst_15 = arith.constant dense<0.000000e+00> : vector<32x128xf32>
    %19 = tpu.matmul %18, %16, %cst_15 {dimension_numbers = #tpu.dot_dimension_numbers<[1], [0], [0], [1], [0, 0, 1, 1], [], []>} : vector<32x32xf32>, vector<32x128xf32>, vector<32x128xf32> -> vector<32x128xf32>
    %c2_16 = arith.constant 2 : index
    %c0_17 = arith.constant 0 : index
    %c0_18 = arith.constant 0 : index
    %20 = vector.load %arg3[%c2_16, %c0_17, %c0_18] : memref<4x32x1xf32, #tpu.memory_space<vmem>>, vector<1x32x1xf32>
    %21 = vector.shape_cast %20 : vector<1x32x1xf32> to vector<32x1xf32>
    %22 = vector.broadcast %21 : vector<32x1xf32> to vector<32x128xf32>
    %23 = arith.addf %19, %22 : vector<32x128xf32>
    %24 = math.tanh %23 : vector<32x128xf32>
    %c3 = arith.constant 3 : index
    %c0_19 = arith.constant 0 : index
    %c0_20 = arith.constant 0 : index
    %25 = vector.load %arg2[%c3, %c0_19, %c0_20] : memref<4x32x32xf32, #tpu.memory_space<vmem>>, vector<1x8x32xf32>
    %26 = vector.shape_cast %25 : vector<1x8x32xf32> to vector<8x32xf32>
    %cst_21 = arith.constant dense<0.000000e+00> : vector<8x128xf32>
    %27 = tpu.matmul %26, %24, %cst_21 {dimension_numbers = #tpu.dot_dimension_numbers<[1], [0], [0], [1], [0, 0, 1, 1], [], []>} : vector<8x32xf32>, vector<32x128xf32>, vector<8x128xf32> -> vector<8x128xf32>
    %c3_22 = arith.constant 3 : index
    %c0_23 = arith.constant 0 : index
    %c0_24 = arith.constant 0 : index
    %28 = vector.load %arg3[%c3_22, %c0_23, %c0_24] : memref<4x32x1xf32, #tpu.memory_space<vmem>>, vector<1x8x1xf32>
    %29 = vector.shape_cast %28 : vector<1x8x1xf32> to vector<8x1xf32>
    %30 = vector.broadcast %29 : vector<8x1xf32> to vector<8x128xf32>
    %31 = arith.addf %27, %30 : vector<8x128xf32>
    %c0_25 = arith.constant 0 : index
    %c0_26 = arith.constant 0 : index
    %32 = vector.load %arg4[%c0_25, %c0_26] : memref<8x128xf32, #tpu.memory_space<vmem>>, vector<8x128xf32>
    tpu.vector_store %arg4[%c0_25, %c0_26], %31 {strides = array<i32>} : memref<8x128xf32, #tpu.memory_space<vmem>>, vector<8x128xf32>,
    return
  }
  func.func @transform_0(%arg0: i32) -> (i32, i32) {
    %c0_i32 = arith.constant 0 : i32
    %c0_i32_0 = arith.constant 0 : i32
    return %c0_i32, %arg0 : i32, i32
  }
  func.func @transform_1(%arg0: i32) -> (i32, i32, i32) {
    %c0_i32 = arith.constant 0 : i32
    %c0_i32_0 = arith.constant 0 : i32
    %c0_i32_1 = arith.constant 0 : i32
    %c0_i32_2 = arith.constant 0 : i32
    return %c0_i32, %c0_i32_0, %c0_i32_1 : i32, i32, i32
  }
  func.func @transform_2(%arg0: i32) -> (i32, i32, i32) {
    %c0_i32 = arith.constant 0 : i32
    %c0_i32_0 = arith.constant 0 : i32
    %c0_i32_1 = arith.constant 0 : i32
    %c0_i32_2 = arith.constant 0 : i32
    return %c0_i32, %c0_i32_0, %c0_i32_1 : i32, i32, i32
  }
  func.func @transform_3(%arg0: i32) -> (i32, i32) {
    %c0_i32 = arith.constant 0 : i32
    %c0_i32_0 = arith.constant 0 : i32
    return %c0_i32, %arg0 : i32, i32
  }
}

</mosaic_0001>

<llo_original>
// kernel: pinn_forward.1
$region0: #{pinn_forward.1}
  #allocation0 [shape = 'u32[]', space=smem, size = 0x4, offset = 0x4, fixed_abs, tag = 'smem constant byte address 0x4 - core index']
  #allocation1 [shape = 'u32[72,128]{1,0:T(1,128)}', space=vmem, size = 0x9000, scoped, tag = 'internal scratch']
  %s0 = inlined_call_operand.vmem [shape: f32[8,128], index: 0, kind: input, shape index: {}]
  %s1 = inlined_call_operand.vmem [shape: f32[4,32,32], index: 1, kind: input, shape index: {}]
  %s2 = inlined_call_operand.vmem [shape: f32[4,32,1], index: 2, kind: input, shape index: {}]
  %s3 = inlined_call_operand.vmem [shape: f32[8,128], index: 3, kind: output, shape index: {}]
  %s4 = sld [smem:[#allocation0]]
  $region22: #{pinn_forward.1} parent=0
    _
  %s6 = ssub.s32 1, %s4
  %s7 = scalar_select 0, %s6, %s4
  // Predicated region
  $region2: #{pinn_forward.1} parent=0 // pred_check
    _
  $region3: #{pinn_forward.1} parent=0 // pred_check_branch
    %9 = sbr.rel (0) target = $region5
  $region4: #{pinn_forward.1} parent=0 // pred_region
    _
  $region5: #{pinn_forward.1} parent=0 // pred_fallthru
    _
  // Predicated region
  $region6: #{pinn_forward.1} parent=0 // pred_check
    _
  $region7: #{pinn_forward.1} parent=0 // pred_check_branch
    %11 = sbr.rel (0) target = $region9
  $region8: #{pinn_forward.1} parent=0 // pred_region
    _
  $region9: #{pinn_forward.1} parent=0 // pred_fallthru
    _
  // Predicated region
  $region10: #{pinn_forward.1} parent=0 // pred_check
    _
  $region11: #{pinn_forward.1} parent=0 // pred_check_branch
    %13 = sbr.rel (0) target = $region13
  $region12: #{pinn_forward.1} parent=0 // pred_region
    _
  $region13: #{pinn_forward.1} parent=0 // pred_fallthru
    _
  %v14 = vld [vmem:[%s0] sm:$0xff]
  %v15 = vld [vmem:[%s1] sm:$0xff]
  %v16 = vld [vmem:[%s1 + $0x8] sm:$0xff]
  %v17 = vld [vmem:[%s1 + $0x10] sm:$0xff]
  %v18 = vld [vmem:[%s1 + $0x18] sm:$0xff]
  %v19 = vld [vmem:[%s2] sm:$0xff]
  %v20 = vld [vmem:[%s2 + $0x8] sm:$0xff]
  %v21 = vld [vmem:[%s2 + $0x10] sm:$0xff]
  %v22 = vld [vmem:[%s2 + $0x18] sm:$0xff]
  %24 = vset.pattern.permute.xlu0 0
  %25 = vperm.xlu0 %24, %v19
  %v26 = vpop.permute.xlu0 %25
  %29 = vset.pattern.permute.xlu0 0
  %30 = vperm.xlu0 %29, %v20
  %v31 = vpop.permute.xlu0 %30
  %34 = vset.pattern.permute.xlu0 0
  %35 = vperm.xlu0 %34, %v21
  %v36 = vpop.permute.xlu0 %35
  %39 = vset.pattern.permute.xlu0 0
  %40 = vperm.xlu0 %39, %v22
  %v41 = vpop.permute.xlu0 %40
  %vm43 = vcmask 64512
  %v45 = vsel %vm43, %v15, 0
  %v48 = vsel %vm43, %v16, 0
  %v51 = vsel %vm43, %v17, 0
  %v54 = vsel %vm43, %v18, 0
  %56 = vmatpush.msra.mxu0 0.0
  %57 = vmatpush.msra.mxu0 0.0
  %58 = vmatpush.msra.mxu0 0.0
  %59 = vmatpush.msra.mxu0 0.0
  %60 = vmatpush.msra.mxu0 0.0
  %61 = vmatpush.msra.mxu0 0.0
  %62 = vmatpush.msra.mxu0 0.0
  %63 = vmatpush.msra.mxu0 0.0
  %64 = vmatpush.msra.mxu0 0.0
  %65 = vmatpush.msra.mxu0 0.0
  %66 = vmatpush.msra.mxu0 0.0
  %67 = vmatpush.msra.mxu0 0.0
  %68 = vmatpush.msra.mxu0 0.0
  %69 = vmatpush.msra.mxu0 0.0
  %70 = vmatpush.msra.mxu0 0.0
  %71 = vmatpush.msra.mxu0 %v14
  %72 = vmatmul.f32.gmra.mxu0 %v45
  %v73 = vpop.f32.mrf.mxu0
  %v74 = vadd.f32 %v26, %v73
  %75 = vmatmul.f32.gmra.mxu0 %v48
  %v76 = vpop.f32.mrf.mxu0
  %v77 = vadd.f32 %v31, %v76
  %78 = vmatmul.f32.gmra.mxu0 %v51
  %v79 = vpop.f32.mrf.mxu0
  %v80 = vadd.f32 %v36, %v79
  %81 = vmatmul.f32.gmra.mxu0 %v54
  %v82 = vpop.f32.mrf.mxu0
  %v83 = vadd.f32 %v41, %v82
  %84 = vdwg.mxu0
  %v85 = vtanh.pop %v74
  %v86 = vtanh.pop %v77
  %v87 = vtanh.pop %v80
  %v88 = vtanh.pop %v83
  %s89 = scalar_lea.vmem %s1, 32
  %v90 = vld [vmem:[%s89] sm:$0xff]
  %v91 = vld [vmem:[%s89 + $0x8] sm:$0xff]
  %v92 = vld [vmem:[%s89 + $0x10] sm:$0xff]
  %v93 = vld [vmem:[%s89 + $0x18] sm:$0xff]
  %s94 = scalar_lea.vmem %s2, 32
  %v95 = vld [vmem:[%s94] sm:$0xff]
  %v96 = vld [vmem:[%s94 + $0x8] sm:$0xff]
  %v97 = vld [vmem:[%s94 + $0x10] sm:$0xff]
  %v98 = vld [vmem:[%s94 + $0x18] sm:$0xff]
  %100 = vset.pattern.permute.xlu0 0
  %101 = vperm.xlu0 %100, %v95
  %v102 = vpop.permute.xlu0 %101
  %105 = vset.pattern.permute.xlu0 0
  %106 = vperm.xlu0 %105, %v96
  %v107 = vpop.permute.xlu0 %106
  %110 = vset.pattern.permute.xlu0 0
  %111 = vperm.xlu0 %110, %v97
  %v112 = vpop.permute.xlu0 %111
  %115 = vset.pattern.permute.xlu0 0
  %116 = vperm.xlu0 %115, %v98
  %v117 = vpop.permute.xlu0 %116
  %vm119 = vcmask 261120
  %v121 = vsel %vm119, %v90, 0
  %v124 = vsel %vm119, %v91, 0
  %v127 = vsel %vm119, %v92, 0
  %v130 = vsel %vm119, %v93, 0
  %132 = vmatpush.msra.mxu0 0.0
  %133 = vmatpush.msra.mxu0 0.0
  %134 = vmatpush.msra.mxu0 0.0
  %135 = vmatpush.msra.mxu0 0.0
  %136 = vmatpush.msra.mxu0 0.0
  %137 = vmatpush.msra.mxu0 0.0
  %138 = vmatpush.msra.mxu0 0.0
  %139 = vmatpush.msra.mxu0 0.0
  %140 = vmatpush.msra.mxu0 0.0
  %141 = vmatpush.msra.mxu0 0.0
  %142 = vmatpush.msra.mxu0 0.0
  %143 = vmatpush.msra.mxu0 0.0
  %144 = vmatpush.msra.mxu0 %v88
  %145 = vmatpush.msra.mxu0 %v87
  %146 = vmatpush.msra.mxu0 %v86
  %147 = vmatpush.msra.mxu0 %v85
  %148 = vmatmul.f32.gmra.mxu0 %v121
  %v149 = vpop.f32.mrf.mxu0
  %v150 = vadd.f32 %v102, %v149
  %151 = vmatmul.f32.gmra.mxu0 %v124
  %v152 = vpop.f32.mrf.mxu0
  %v153 = vadd.f32 %v107, %v152
  %154 = vmatmul.f32.gmra.mxu0 %v127
  %v155 = vpop.f32.mrf.mxu0
  %v156 = vadd.f32 %v112, %v155
  %157 = vmatmul.f32.gmra.mxu0 %v130
  %v158 = vpop.f32.mrf.mxu0
  %v159 = vadd.f32 %v117, %v158
  %160 = vdwg.mxu0
  %v161 = vtanh.pop %v150
  %v162 = vtanh.pop %v153
  %v163 = vtanh.pop %v156
  %v164 = vtanh.pop %v159
  %s165 = scalar_lea.vmem %s1, 64
  %v166 = vld [vmem:[%s165] sm:$0xff]
  %v167 = vld [vmem:[%s165 + $0x8] sm:$0xff]
  %v168 = vld [vmem:[%s165 + $0x10] sm:$0xff]
  %v169 = vld [vmem:[%s165 + $0x18] sm:$0xff]
  %s170 = scalar_lea.vmem %s2, 64
  %v171 = vld [vmem:[%s170] sm:$0xff]
  %v172 = vld [vmem:[%s170 + $0x8] sm:$0xff]
  %v173 = vld [vmem:[%s170 + $0x10] sm:$0xff]
  %v174 = vld [vmem:[%s170 + $0x18] sm:$0xff]
  %176 = vset.pattern.permute.xlu0 0
  %177 = vperm.xlu0 %176, %v171
  %v178 = vpop.permute.xlu0 %177
  %181 = vset.pattern.permute.xlu0 0
  %182 = vperm.xlu0 %181, %v172
  %v183 = vpop.permute.xlu0 %182
  %186 = vset.pattern.permute.xlu0 0
  %187 = vperm.xlu0 %186, %v173
  %v188 = vpop.permute.xlu0 %187
  %191 = vset.pattern.permute.xlu0 0
  %192 = vperm.xlu0 %191, %v174
  %v193 = vpop.permute.xlu0 %192
  %v196 = vsel %vm119, %v166, 0
  %v199 = vsel %vm119, %v167, 0
  %v202 = vsel %vm119, %v168, 0
  %v205 = vsel %vm119, %v169, 0
  %207 = vmatpush.msra.mxu0 0.0
  %208 = vmatpush.msra.mxu0 0.0
  %209 = vmatpush.msra.mxu0 0.0
  %210 = vmatpush.msra.mxu0 0.0
  %211 = vmatpush.msra.mxu0 0.0
  %212 = vmatpush.msra.mxu0 0.0
  %213 = vmatpush.msra.mxu0 0.0
  %214 = vmatpush.msra.mxu0 0.0
  %215 = vmatpush.msra.mxu0 0.0
  %216 = vmatpush.msra.mxu0 0.0
  %217 = vmatpush.msra.mxu0 0.0
  %218 = vmatpush.msra.mxu0 0.0
  %219 = vmatpush.msra.mxu0 %v164
  %220 = vmatpush.msra.mxu0 %v163
  %221 = vmatpush.msra.mxu0 %v162
  %222 = vmatpush.msra.mxu0 %v161
  %223 = vmatmul.f32.gmra.mxu0 %v196
  %v224 = vpop.f32.mrf.mxu0
  %v225 = vadd.f32 %v178, %v224
  %226 = vmatmul.f32.gmra.mxu0 %v199
  %v227 = vpop.f32.mrf.mxu0
  %v228 = vadd.f32 %v183, %v227
  %229 = vmatmul.f32.gmra.mxu0 %v202
  %v230 = vpop.f32.mrf.mxu0
  %v231 = vadd.f32 %v188, %v230
  %232 = vmatmul.f32.gmra.mxu0 %v205
  %v233 = vpop.f32.mrf.mxu0
  %v234 = vadd.f32 %v193, %v233
  %235 = vdwg.mxu0
  %v236 = vtanh.pop %v225
  %v237 = vtanh.pop %v228
  %v238 = vtanh.pop %v231
  %v239 = vtanh.pop %v234
  %s240 = scalar_lea.vmem %s1, 96
  %v241 = vld [vmem:[%s240] sm:$0xff]
  %s242 = scalar_lea.vmem %s2, 96
  %v243 = vld [vmem:[%s242] sm:$0xff]
  %245 = vset.pattern.permute.xlu0 0
  %246 = vperm.xlu0 %245, %v243
  %v247 = vpop.permute.xlu0 %246
  %v250 = vsel %vm119, %v241, 0
  %252 = vmatpush.msra.mxu0 0.0
  %253 = vmatpush.msra.mxu0 0.0
  %254 = vmatpush.msra.mxu0 0.0
  %255 = vmatpush.msra.mxu0 0.0
  %256 = vmatpush.msra.mxu0 0.0
  %257 = vmatpush.msra.mxu0 0.0
  %258 = vmatpush.msra.mxu0 0.0
  %259 = vmatpush.msra.mxu0 0.0
  %260 = vmatpush.msra.mxu0 0.0
  %261 = vmatpush.msra.mxu0 0.0
  %262 = vmatpush.msra.mxu0 0.0
  %263 = vmatpush.msra.mxu0 0.0
  %264 = vmatpush.msra.mxu0 %v239
  %265 = vmatpush.msra.mxu0 %v238
  %266 = vmatpush.msra.mxu0 %v237
  %267 = vmatpush.msra.mxu0 %v236
  %268 = vmatmul.f32.gmra.mxu0 %v250
  %v269 = vpop.f32.mrf.mxu0
  %v270 = vadd.f32 %v247, %v269
  %271 = vdwg.mxu0
  %272 = vst [vmem:[%s3] sm:$0xff] %v270
  // Predicated region
  $region14: #{pinn_forward.1} parent=0 // pred_check
    _
  $region15: #{pinn_forward.1} parent=0 // pred_check_branch
    %274 = sbr.rel (0) target = $region17
  $region16: #{pinn_forward.1} parent=0 // pred_region
    _
  $region17: #{pinn_forward.1} parent=0 // pred_fallthru
    _
  // Predicated region
  $region18: #{pinn_forward.1} parent=0 // pred_check
    _
  $region19: #{pinn_forward.1} parent=0 // pred_check_branch
    %276 = sbr.rel (0) target = $region21
  $region20: #{pinn_forward.1} parent=0 // pred_region
    _
  $region21: #{pinn_forward.1} parent=0 // pred_fallthru
    _

</llo_original>
